<compile_context>
chip_gen: v7x
topology: tpu7x:2x2x1
jax: 0.10.0
libtpu: 0.0.40
codegen_flags: <defaults>
</compile_context>

<pallas_src>
import jax
import jax.numpy as jnp
from jax.experimental import pallas as pl
from jax.experimental.pallas import tpu as pltpu

_SUBLANE = 8


def _one_hot_kernel(types_ref, out_ref):
    # types_ref: (tile, 1) int32          -- one atom type per output row (sublane)
    # out_ref  : (tile, num_types) dtype  -- final [atoms, types] layout
    t = types_ref[...]                                                    # (tile, 1)
    class_iota = jax.lax.broadcasted_iota(jnp.int32, out_ref.shape, 1)    # (tile, T)
    out_ref[...] = (class_iota == t).astype(out_ref.dtype)


def one_hot_atom_encoding(pos: jax.Array, atom_types: jax.Array, num_types: int,
                          tile_atoms: int = 2048) -> jax.Array:
    """Pallas implementation of OneHotAtomEncoding.forward.

    pos        : [num_atoms, 3]  (only its dtype is used, matching the torch module)
    atom_types : [num_atoms] or [num_atoms, 1] integer atom types
    returns    : [num_atoms, num_types] one-hot, dtype = pos.dtype
    """
    # squeeze(-1) semantics (no-op if already 1-D)
    if atom_types.ndim > 1 and atom_types.shape[-1] == 1:
        atom_types = jnp.squeeze(atom_types, axis=-1)
    atom_types = atom_types.astype(jnp.int32)
    num_atoms = atom_types.shape[0]

    # Sublane-aligned row tile: one block when small, else fixed large tiles.
    tile_atoms = pl.cdiv(tile_atoms, _SUBLANE) * _SUBLANE
    tile = min(tile_atoms, max(_SUBLANE, pl.cdiv(num_atoms, _SUBLANE) * _SUBLANE))
    grid = (pl.cdiv(num_atoms, tile),)

    types_col = atom_types[:, None]  # (num_atoms, 1) -- class id per output row

    return pl.pallas_call(
        _one_hot_kernel,
        out_shape=jax.ShapeDtypeStruct((num_atoms, num_types), pos.dtype),
        grid_spec=pltpu.PrefetchScalarGridSpec(
            num_scalar_prefetch=0,
            grid=grid,
            in_specs=[pl.BlockSpec((tile, 1), lambda i: (i, 0))],
            out_specs=pl.BlockSpec((tile, num_types), lambda i: (i, 0)),
        ),
        compiler_params=pltpu.CompilerParams(dimension_semantics=("parallel",)),
    )(types_col)


if __name__ == "__main__":
    key = jax.random.PRNGKey(0)
    k_pos, k_types = jax.random.split(key)

    # Small, module-consistent shapes.
    num_atoms = 64
    num_types = 5

    pos = jax.random.normal(k_pos, (num_atoms, 3), dtype=jnp.float32)
    atom_types = jax.random.randint(k_types, (num_atoms,), 0, num_types, dtype=jnp.int32)

    node_attrs = one_hot_atom_encoding(pos, atom_types, num_types)
    node_attrs = jax.block_until_ready(node_attrs)

    ref = jax.nn.one_hot(atom_types, num_types, dtype=pos.dtype)
    assert node_attrs.shape == (num_atoms, num_types)
    assert node_attrs.dtype == pos.dtype
    assert bool(jnp.all(node_attrs == ref))

    # Non-8-aligned atom count + [num_atoms, 1] input (squeeze path) + bf16 dtype
    # + multi-tile grid (tile_atoms=128 forces several grid steps and an edge block).
    n2 = 300
    k3, k4 = jax.random.split(k_types)
    pos2 = jax.random.normal(k3, (n2, 3), dtype=jnp.bfloat16)
    types2 = jax.random.randint(k4, (n2, 1), 0, num_types, dtype=jnp.int32)
    out2 = jax.block_until_ready(
        one_hot_atom_encoding(pos2, types2, num_types, tile_atoms=128))
    ref2 = jax.nn.one_hot(jnp.squeeze(types2, -1), num_types, dtype=pos2.dtype)
    assert out2.shape == (n2, num_types)
    assert out2.dtype == pos2.dtype
    assert bool(jnp.all(out2 == ref2))

    print("KERNEL_OK")
</pallas_src>

<mosaic_0001>
module attributes {stable_mosaic.version = 11 : i64} {
  func.func @_one_hot_kernel(%arg0: i32, %arg1: memref<64x1xi32, #tpu.memory_space<vmem>>, %arg2: memref<64x5xf32, #tpu.memory_space<vmem>>) attributes {dimension_semantics = [#tpu.dimension_semantics<parallel>], iteration_bounds = array<i64: 1>, scalar_prefetch = 0 : i64, scratch_operands = 0 : i64, tpu.core_type = #tpu.core_type<tc>, window_params = [{transform_indices = @transform_0, window_bounds = array<i64: 64, 1>}, {transform_indices = @transform_1, window_bounds = array<i64: 64, 5>}]} {
    %c0 = arith.constant 0 : index
    %c0_0 = arith.constant 0 : index
    %0 = vector.load %arg1[%c0, %c0_0] : memref<64x1xi32, #tpu.memory_space<vmem>>, vector<64x1xi32>
    %1 = tpu.iota {dimensions = array<i32: 1>} : vector<64x5xi32>
    %2 = vector.broadcast %0 : vector<64x1xi32> to vector<64x5xi32>
    %3 = arith.cmpi eq, %1, %2 : vector<64x5xi32>
    %4 = arith.extui %3 : vector<64x5xi1> to vector<64x5xi32>
    %5 = arith.sitofp %4 : vector<64x5xi32> to vector<64x5xf32>
    %c0_1 = arith.constant 0 : index
    %c0_2 = arith.constant 0 : index
    %6 = vector.load %arg2[%c0_1, %c0_2] : memref<64x5xf32, #tpu.memory_space<vmem>>, vector<64x5xf32>
    tpu.vector_store %arg2[%c0_1, %c0_2], %5 {strides = array<i32>} : memref<64x5xf32, #tpu.memory_space<vmem>>, vector<64x5xf32>,
    return
  }
  func.func @transform_0(%arg0: i32) -> (i32, i32) {
    %c0_i32 = arith.constant 0 : i32
    %c0_i32_0 = arith.constant 0 : i32
    return %arg0, %c0_i32 : i32, i32
  }
  func.func @transform_1(%arg0: i32) -> (i32, i32) {
    %c0_i32 = arith.constant 0 : i32
    %c0_i32_0 = arith.constant 0 : i32
    return %arg0, %c0_i32 : i32, i32
  }
}

</mosaic_0001>

<llo_original>
// kernel: tpu_custom_call.1
$region0: #{tpu_custom_call.1}
  #allocation0 [shape = 'u32[]', space=smem, size = 0x4, offset = 0x4, fixed_abs, tag = 'smem constant byte address 0x4 - core index']
  #allocation1 [shape = 'u32[144,128]{1,0:T(1,128)}', space=vmem, size = 0x12000, scoped, tag = 'internal scratch']
  %s0 = inlined_call_operand.vmem [shape: s32[64,1], index: 0, kind: input, shape index: {}]
  %s1 = inlined_call_operand.vmem [shape: f32[64,5], index: 1, kind: output, shape index: {}]
  %s2 = sld [smem:[#allocation0]]
  $region14: #{tpu_custom_call.1} parent=0
    _
  %s4 = ssub.s32 1, %s2
  %s5 = scalar_select 0, %s4, %s2
  // Predicated region
  $region2: #{tpu_custom_call.1} parent=0 // pred_check
    _
  $region3: #{tpu_custom_call.1} parent=0 // pred_check_branch
    %7 = sbr.rel (0) target = $region5
  $region4: #{tpu_custom_call.1} parent=0 // pred_region
    _
  $region5: #{tpu_custom_call.1} parent=0 // pred_fallthru
    _
  %v8 = vld [vmem:[%s0] sm:$0xff]
  %v9 = vld [vmem:[%s0 + $0x8] sm:$0xff]
  %v10 = vld [vmem:[%s0 + $0x10] sm:$0xff]
  %v11 = vld [vmem:[%s0 + $0x18] sm:$0xff]
  %v12 = vld [vmem:[%s0 + $0x20] sm:$0xff]
  %v13 = vld [vmem:[%s0 + $0x28] sm:$0xff]
  %v14 = vld [vmem:[%s0 + $0x30] sm:$0xff]
  %v15 = vld [vmem:[%s0 + $0x38] sm:$0xff]
  %v16 = vlaneseq
  %v17 = vand.u32 %v16, 127
  %18 = vset.pattern.permute.xlu0 0
  %19 = vperm.xlu0 %18, %v8
  %v20 = vpop.permute.xlu0 %19
  %21 = vset.pattern.permute.xlu0 0
  %22 = vperm.xlu0 %21, %v9
  %v23 = vpop.permute.xlu0 %22
  %24 = vset.pattern.permute.xlu0 0
  %25 = vperm.xlu0 %24, %v10
  %v26 = vpop.permute.xlu0 %25
  %27 = vset.pattern.permute.xlu0 0
  %28 = vperm.xlu0 %27, %v11
  %v29 = vpop.permute.xlu0 %28
  %30 = vset.pattern.permute.xlu0 0
  %31 = vperm.xlu0 %30, %v12
  %v32 = vpop.permute.xlu0 %31
  %33 = vset.pattern.permute.xlu0 0
  %34 = vperm.xlu0 %33, %v13
  %v35 = vpop.permute.xlu0 %34
  %36 = vset.pattern.permute.xlu0 0
  %37 = vperm.xlu0 %36, %v14
  %v38 = vpop.permute.xlu0 %37
  %39 = vset.pattern.permute.xlu0 0
  %40 = vperm.xlu0 %39, %v15
  %v41 = vpop.permute.xlu0 %40
  %vm42 = vcmp.eq.s32.totalorder %v17, %v20
  %vm43 = vcmp.eq.s32.totalorder %v17, %v23
  %vm44 = vcmp.eq.s32.totalorder %v17, %v26
  %vm45 = vcmp.eq.s32.totalorder %v17, %v29
  %vm46 = vcmp.eq.s32.totalorder %v17, %v32
  %vm47 = vcmp.eq.s32.totalorder %v17, %v35
  %vm48 = vcmp.eq.s32.totalorder %v17, %v38
  %vm49 = vcmp.eq.s32.totalorder %v17, %v41
  %v50 = vsel %vm42, 1, 0
  %v51 = vsel %vm43, 1, 0
  %v52 = vsel %vm44, 1, 0
  %v53 = vsel %vm45, 1, 0
  %v54 = vsel %vm46, 1, 0
  %v55 = vsel %vm47, 1, 0
  %v56 = vsel %vm48, 1, 0
  %v57 = vsel %vm49, 1, 0
  %v58 = vcvt.s32.f32 %v50
  %v59 = vcvt.s32.f32 %v51
  %v60 = vcvt.s32.f32 %v52
  %v61 = vcvt.s32.f32 %v53
  %v62 = vcvt.s32.f32 %v54
  %v63 = vcvt.s32.f32 %v55
  %v64 = vcvt.s32.f32 %v56
  %v65 = vcvt.s32.f32 %v57
  %vm66 = vcmask 39936
  %67 = vst.msk [vmem:[%s1] sm:$0xff] %vm66, %v58
  %68 = vst.msk [vmem:[%s1 + $0x8] sm:$0xff] %vm66, %v59
  %69 = vst.msk [vmem:[%s1 + $0x10] sm:$0xff] %vm66, %v60
  %70 = vst.msk [vmem:[%s1 + $0x18] sm:$0xff] %vm66, %v61
  %71 = vst.msk [vmem:[%s1 + $0x20] sm:$0xff] %vm66, %v62
  %72 = vst.msk [vmem:[%s1 + $0x28] sm:$0xff] %vm66, %v63
  %73 = vst.msk [vmem:[%s1 + $0x30] sm:$0xff] %vm66, %v64
  %74 = vst.msk [vmem:[%s1 + $0x38] sm:$0xff] %vm66, %v65
  // Predicated region
  $region6: #{tpu_custom_call.1} parent=0 // pred_check
    _
  $region7: #{tpu_custom_call.1} parent=0 // pred_check_branch
    %76 = sbr.rel (0) target = $region9
  $region8: #{tpu_custom_call.1} parent=0 // pred_region
    _
  $region9: #{tpu_custom_call.1} parent=0 // pred_fallthru
    _
  // Predicated region
  $region10: #{tpu_custom_call.1} parent=0 // pred_check
    _
  $region11: #{tpu_custom_call.1} parent=0 // pred_check_branch
    %78 = sbr.rel (0) target = $region13
  $region12: #{tpu_custom_call.1} parent=0 // pred_region
    _
  $region13: #{tpu_custom_call.1} parent=0 // pred_fallthru
    _

</llo_original>
